<compile_context>
chip_gen: v6e
topology: v6e:2x2x1
jax: 0.10.0
libtpu: 0.0.40
codegen_flags: <defaults>
</compile_context>

<pallas_src>
import functools
import math

import jax
import jax.numpy as jnp
from jax.experimental import pallas as pl
from jax.experimental.pallas import tpu as pltpu


def _round_up(x: int, m: int) -> int:
    return ((x + m - 1) // m) * m


def _gap_kernel(x_ref, o_ref, *scratch, tile_r, tile_l, L, num_l, mask_l):
    """One (row-tile, L-tile) grid step.

    Row sums are accumulated with pure-VPU lane-aligned 128-wide slab adds in
    f32; the cross-lane reduce + lane-dense transpose runs once per row tile at
    finalize via a tiny HIGHEST-precision MXU matmul against ones(8, w).
    """
    li = pl.program_id(1)
    slab_w = tile_l if tile_l < 128 else 128

    def row_partial(x):
        # x: (tile_r, tile_l) input dtype -> (tile_r, slab_w) f32 per-lane sums.
        p = x[:, 0:slab_w].astype(jnp.float32)
        for g in range(1, tile_l // 128):
            p = p + x[:, g * 128:(g + 1) * 128].astype(jnp.float32)
        return p

    def mask_tail(x):
        # Select (never multiply-by-0) so NaN/Inf garbage lanes can't poison
        # the accumulator. Small (1, tile_l) iota, broadcast by the select.
        col = jax.lax.broadcasted_iota(jnp.int32, (1, tile_l), 1)
        keep = (li * tile_l + col) < L
        return jnp.where(keep, x, jnp.zeros_like(x))

    def finalize(src):
        # src: (tile_r, slab_w) f32 partial sums.  Cross-lane sum + transpose
        # to lane-dense (1, tile_r) in one small MXU op.  HIGHEST keeps ~f32
        # accuracy; it runs only once per row tile so its cost is hidden.
        ones = jnp.ones((8, slab_w), jnp.float32)
        lane = jax.lax.dot_general(
            ones, src,
            dimension_numbers=(((1,), (1,)), ((), ())),
            preferred_element_type=jnp.float32,
            precision=jax.lax.Precision.HIGHEST)
        o_ref[0] = (lane[0:1, :] * (1.0 / L)).astype(o_ref.dtype)

    if num_l == 1:
        # Single L block: no accumulator, no zero-init, write output directly.
        x = x_ref[...]
        if mask_l:
            x = mask_tail(x)
        finalize(row_partial(x))
    else:
        acc_ref = scratch[0]
        is_last = li == num_l - 1

        @pl.when(li == 0)
        def _init():
            acc_ref[...] = jnp.zeros_like(acc_ref)

        if mask_l:
            # Tail mask only executes on the (single) last L step.
            @pl.when(li != num_l - 1)
            def _body():
                acc_ref[...] += row_partial(x_ref[...])

            @pl.when(is_last)
            def _tail():
                acc_ref[...] += row_partial(mask_tail(x_ref[...]))
                finalize(acc_ref[...])
        else:
            acc_ref[...] += row_partial(x_ref[...])

            @pl.when(is_last)
            def _finish():
                finalize(acc_ref[...])


def _block_budget_bytes() -> int:
    """Per-input-block byte budget, sized per TPU generation's VMEM."""
    block_bytes = 10 * 1024 * 1024          # safe on v7x (64 MiB VMEM / TC)
    try:
        info = pltpu.get_tpu_info()
        if int(info.vmem_capacity_bytes) >= 96 * 1024 * 1024:
            block_bytes = 16 * 1024 * 1024   # v5e / v6e (128 MiB VMEM)
    except Exception:
        pass
    return block_bytes


def global_average_pooling(x: jnp.ndarray, *, tile_r: int = 512,
                           max_block_bytes: int | None = None) -> jnp.ndarray:
    """Mean over the last axis, matching torch's x.mean(dim=-1)."""
    orig_shape = x.shape
    L = int(orig_shape[-1])
    rows = int(math.prod(orig_shape[:-1]))
    x2d = x.reshape(rows, L)
    itemsize = jnp.dtype(x.dtype).itemsize

    if max_block_bytes is None:
        max_block_bytes = _block_budget_bytes()

    # Row tile: lane-dense (multiple of 128) and >=2 tiles whenever rows allow,
    # so the "parallel" grid axis feeds both v7x TensorCores.
    if rows > 128:
        tile_r_eff = min(_round_up(max(tile_r, 128), 128),
                         max(128, _round_up(pl.cdiv(rows, 2), 128)))
    else:
        tile_r_eff = rows  # block dim == full array dim is always legal
        # TODO(synk): for tiny rows with huge L on v7x, also split the L
        # reduction across the two TensorCores (combine partials in wrapper).
    num_row_tiles = pl.cdiv(rows, tile_r_eff)

    # L tile: whole (128-padded) reduction axis in one block when it fits the
    # per-block budget; otherwise 128-multiples accumulated across a trailing
    # "arbitrary" grid axis into an f32 VMEM scratch.
    max_l = max(128, (max_block_bytes // (tile_r_eff * itemsize)) // 128 * 128)
    if L <= 128:
        tile_l = L
    else:
        tile_l = min(max_l, _round_up(L, 128))
    num_l = pl.cdiv(L, tile_l)
    mask_l = (L % tile_l) != 0

    kernel = functools.partial(
        _gap_kernel, tile_r=tile_r_eff, tile_l=tile_l, L=L, num_l=num_l,
        mask_l=mask_l)

    scratch_shapes = []
    if num_l > 1:
        scratch_shapes.append(pltpu.VMEM((tile_r_eff, 128), jnp.float32))

    block_bytes = tile_r_eff * tile_l * itemsize
    vmem_limit = int(min(2 * block_bytes + 16 * 1024 * 1024, 48 * 1024 * 1024))

    out = pl.pallas_call(
        kernel,
        out_shape=jax.ShapeDtypeStruct((num_row_tiles, 1, tile_r_eff), x.dtype),
        grid_spec=pltpu.PrefetchScalarGridSpec(
            num_scalar_prefetch=0,
            grid=(num_row_tiles, num_l),
            in_specs=[pl.BlockSpec((tile_r_eff, tile_l), lambda i, l: (i, l))],
            out_specs=pl.BlockSpec((1, 1, tile_r_eff), lambda i, l: (i, 0, 0)),
            scratch_shapes=scratch_shapes,
        ),
        compiler_params=pltpu.CompilerParams(
            dimension_semantics=("parallel", "arbitrary"),
            vmem_limit_bytes=vmem_limit,
        ),
        cost_estimate=pl.CostEstimate(
            flops=2 * rows * L, transcendentals=0,
            bytes_accessed=rows * L * itemsize + rows * itemsize),
    )(x2d)

    out = out.reshape(num_row_tiles * tile_r_eff)[:rows]
    return out.reshape(orig_shape[:-1])


if __name__ == "__main__":
    key = jax.random.PRNGKey(0)

    # (B, C, L) -> (B, C), matching the module's forward at small shapes.
    B, C, L = 2, 4, 16
    x = jax.random.normal(key, (B, C, L), dtype=jnp.float32)
    y = global_average_pooling(x)
    jax.block_until_ready(y)
    y_ref = jnp.mean(x, axis=-1)
    assert y.shape == (B, C), y.shape
    assert jnp.allclose(y, y_ref, atol=1e-5, rtol=1e-5), float(
        jnp.max(jnp.abs(y - y_ref)))

    # Tiled-L accumulator path with a masked (non-divisible) tail block.
    x2 = jax.random.normal(jax.random.PRNGKey(1), (2, 8, 400), dtype=jnp.float32)
    y2 = global_average_pooling(x2, max_block_bytes=8 * 1024)
    jax.block_until_ready(y2)
    y2_ref = jnp.mean(x2, axis=-1)
    assert y2.shape == (2, 8), y2.shape
    assert jnp.allclose(y2, y2_ref, atol=1e-5, rtol=1e-5), float(
        jnp.max(jnp.abs(y2 - y2_ref)))

    # Multiple lane-dense row tiles, single-L-block fast path (no accumulator).
    x3 = jax.random.normal(jax.random.PRNGKey(2), (4, 128, 1024),
                           dtype=jnp.float32)
    y3 = global_average_pooling(x3)
    jax.block_until_ready(y3)
    y3_ref = jnp.mean(x3, axis=-1)
    assert y3.shape == (4, 128), y3.shape
    assert jnp.allclose(y3, y3_ref, atol=1e-5, rtol=1e-5), float(
        jnp.max(jnp.abs(y3 - y3_ref)))

    # bf16 inputs: widened to f32 inside the kernel, bf16 output.
    x4 = jax.random.normal(jax.random.PRNGKey(3), (2, 8, 64), dtype=jnp.bfloat16)
    y4 = global_average_pooling(x4)
    jax.block_until_ready(y4)
    y4_ref = jnp.mean(x4.astype(jnp.float32), axis=-1).astype(jnp.bfloat16)
    assert y4.shape == (2, 8), y4.shape
    assert jnp.allclose(y4.astype(jnp.float32), y4_ref.astype(jnp.float32),
                        atol=2e-2, rtol=2e-2), "bf16 mismatch"

    print("KERNEL_OK")
</pallas_src>

<mosaic_0001>
module attributes {stable_mosaic.version = 11 : i64} {
  func.func @_gap_kernel(%arg0: i32, %arg1: i32, %arg2: memref<8x16xf32, #tpu.memory_space<vmem>>, %arg3: memref<1x1x8xf32, #tpu.memory_space<vmem>>) attributes {dimension_semantics = [#tpu.dimension_semantics<parallel>, #tpu.dimension_semantics<arbitrary>], iteration_bounds = array<i64: 1, 1>, scalar_prefetch = 0 : i64, scratch_operands = 0 : i64, tpu.core_type = #tpu.core_type<tc>, window_params = [{transform_indices = @transform_0, window_bounds = array<i64: 8, 16>}, {transform_indices = @transform_1, window_bounds = array<i64: 1, 1, 8>}]} {
    %c0 = arith.constant 0 : index
    %c0_0 = arith.constant 0 : index
    %0 = vector.load %arg2[%c0, %c0_0] : memref<8x16xf32, #tpu.memory_space<vmem>>, vector<8x16xf32>
    %cst = arith.constant 1.000000e+00 : f32
    %1 = vector.broadcast %cst : f32 to vector<8x16xf32>
    %cst_1 = arith.constant dense<0.000000e+00> : vector<8x8xf32>
    %2 = tpu.matmul %1, %0, %cst_1 {dimension_numbers = #tpu.dot_dimension_numbers<[1], [1], [0], [0], [0, 0, 1, 0], [], []>, precision = #tpu.contract_precision<fp32>} : vector<8x16xf32>, vector<8x16xf32>, vector<8x8xf32> -> vector<8x8xf32>
    %3 = vector.extract_strided_slice %2 {offsets = [0, 0], sizes = [1, 8], strides = [1, 1]} : vector<8x8xf32> to vector<1x8xf32>
    %cst_2 = arith.constant 6.250000e-02 : f32
    %4 = vector.broadcast %cst_2 : f32 to vector<1x8xf32>
    %5 = arith.mulf %3, %4 : vector<1x8xf32>
    %c0_3 = arith.constant 0 : index
    %c0_4 = arith.constant 0 : index
    %c0_5 = arith.constant 0 : index
    %6 = vector.load %arg3[%c0_3, %c0_4, %c0_5] : memref<1x1x8xf32, #tpu.memory_space<vmem>>, vector<1x1x8xf32>
    %7 = vector.shape_cast %6 : vector<1x1x8xf32> to vector<1x8xf32>
    %8 = vector.shape_cast %5 : vector<1x8xf32> to vector<1x1x8xf32>
    tpu.vector_store %arg3[%c0_3, %c0_4, %c0_5], %8 {strides = array<i32>} : memref<1x1x8xf32, #tpu.memory_space<vmem>>, vector<1x1x8xf32>,
    return
  }
  func.func @transform_0(%arg0: i32, %arg1: i32) -> (i32, i32) {
    %c0_i32 = arith.constant 0 : i32
    return %arg0, %arg1 : i32, i32
  }
  func.func @transform_1(%arg0: i32, %arg1: i32) -> (i32, i32, i32) {
    %c0_i32 = arith.constant 0 : i32
    %c0_i32_0 = arith.constant 0 : i32
    %c0_i32_1 = arith.constant 0 : i32
    return %arg0, %c0_i32, %c0_i32_0 : i32, i32, i32
  }
}

</mosaic_0001>

<llo_original>
// kernel: tpu_custom_call.1
$region0: #{tpu_custom_call.1}
  #allocation0 [shape = 'u32[]', space=smem, size = 0x4, offset = 0x4, fixed_abs, tag = 'smem constant byte address 0x4 - core index']
  #allocation1 [shape = 'u32[144,128]{1,0:T(1,128)}', space=vmem, size = 0x12000, scoped, tag = 'internal scratch']
  %s0 = inlined_call_operand.hbm [shape: f32[8,16], index: 0, kind: input, shape index: {}]
  %s1 = inlined_call_operand.hbm [shape: f32[1,1,8], index: 1, kind: output, shape index: {}]
  %s2 = sld [smem:[#allocation0]]
  $region18: #{tpu_custom_call.1} parent=0
    _
  %s4 = ssub.s32 1, %s2
  %s5 = scalar_select 0, %s4, %s2
  $region1: #{tpu_custom_call.1} parent=0
    #allocation2 [shape = 'u8[4096]{0}', space=vmem, size = 0x1000, scoped, tag = 'input window, operand 0, single buffered']
    #allocation3 [shape = 's32[1]{0}', space=sflag, size = 0x4, scoped, tag = 'scoped memory for tpu_custom_call.1']
    #allocation4 [shape = 's32[1]{0}', space=sflag, size = 0x4, scoped, tag = 'scoped memory for tpu_custom_call.1']
    #allocation5 [shape = 'u8[512]{0}', space=vmem, size = 0x400, scoped, tag = 'output window, operand 0, single buffered']
    %6 = vsyncpa [#allocation3], 0
    %7 = vsyncpa [#allocation4], 0
    // Predicated region
    $region2: #{tpu_custom_call.1} parent=1 // pred_check
      _
    $region3: #{tpu_custom_call.1} parent=1 // pred_check_branch
      %9 = sbr.rel (0) target = $region5
    $region4: #{tpu_custom_call.1} parent=1 // pred_region
      %s11 = ssub.s32 128, 128
      %12 = vsyncadd [#allocation3], %s11
      %s14 = sshll.u32 [#allocation2], 4
      %s15 = int_to_ptr.vmem [resolvable:$true] %s14
      %17 = dma.hbm_to_vmem [thread:$0]  %s0, 128, %s15, [#allocation3]
    $region5: #{tpu_custom_call.1} parent=1 // pred_fallthru
      _
    // Predicated region
    $region6: #{tpu_custom_call.1} parent=1 // pred_check
      _
    $region7: #{tpu_custom_call.1} parent=1 // pred_check_branch
      %19 = sbr.rel (0) target = $region9
    $region8: #{tpu_custom_call.1} parent=1 // pred_region
      %20 = dma.done [#allocation3], 128
    $region9: #{tpu_custom_call.1} parent=1 // pred_fallthru
      _
    %v21 = vld [vmem:[#allocation2] sm:$0xff]
    %vm22 = vcmask 130048
    %v24 = vsel %vm22, 1.0, 0
    %v27 = vsel %vm22, %v21, 0
    %29 = vmatprep.subr.mxu0 0.0
    %30 = vmatpush1.xpose.msra.mxu0 0.0
    %31 = vmatprep.subr.mxu0 0.0
    %32 = vmatpush1.xpose.msra.mxu0 0.0
    %33 = vmatprep.subr.mxu0 0.0
    %34 = vmatpush1.xpose.msra.mxu0 0.0
    %35 = vmatprep.subr.mxu0 0.0
    %36 = vmatpush1.xpose.msra.mxu0 0.0
    %37 = vmatprep.subr.mxu0 0.0
    %38 = vmatpush1.xpose.msra.mxu0 0.0
    %39 = vmatprep.subr.mxu0 0.0
    %40 = vmatpush1.xpose.msra.mxu0 0.0
    %41 = vmatprep.subr.mxu0 0.0
    %42 = vmatpush1.xpose.msra.mxu0 0.0
    %43 = vmatprep.subr.mxu0 0.0
    %44 = vmatpush1.xpose.msra.mxu0 0.0
    %45 = vmatprep.subr.mxu0 0.0
    %46 = vmatpush1.xpose.msra.mxu0 0.0
    %47 = vmatprep.subr.mxu0 0.0
    %48 = vmatpush1.xpose.msra.mxu0 0.0
    %49 = vmatprep.subr.mxu0 0.0
    %50 = vmatpush1.xpose.msra.mxu0 0.0
    %51 = vmatprep.subr.mxu0 0.0
    %52 = vmatpush1.xpose.msra.mxu0 0.0
    %53 = vmatprep.subr.mxu0 0.0
    %54 = vmatpush1.xpose.msra.mxu0 0.0
    %55 = vmatprep.subr.mxu0 0.0
    %56 = vmatpush1.xpose.msra.mxu0 0.0
    %57 = vmatprep.subr.mxu0 0.0
    %58 = vmatpush1.xpose.msra.mxu0 0.0
    %59 = vmatprep.subr.mxu0 0.0
    %v60 = vand.u32 %v27, 4294901760
    %61 = vmatpush1.xpose.msra.mxu0 %v60
    %62 = vmatprep.subr.mxu0 0.0
    %63 = vmatpush2.xpose.msra.mxu0 0.0
    %64 = vmatprep.subr.mxu0 0.0
    %65 = vmatpush2.xpose.msra.mxu0 0.0
    %66 = vmatprep.subr.mxu0 0.0
    %67 = vmatpush2.xpose.msra.mxu0 0.0
    %68 = vmatprep.subr.mxu0 0.0
    %69 = vmatpush2.xpose.msra.mxu0 0.0
    %70 = vmatprep.subr.mxu0 0.0
    %71 = vmatpush2.xpose.msra.mxu0 0.0
    %72 = vmatprep.subr.mxu0 0.0
    %73 = vmatpush2.xpose.msra.mxu0 0.0
    %74 = vmatprep.subr.mxu0 0.0
    %75 = vmatpush2.xpose.msra.mxu0 0.0
    %76 = vmatprep.subr.mxu0 0.0
    %77 = vmatpush2.xpose.msra.mxu0 0.0
    %78 = vmatprep.subr.mxu0 0.0
    %79 = vmatpush2.xpose.msra.mxu0 0.0
    %80 = vmatprep.subr.mxu0 0.0
    %81 = vmatpush2.xpose.msra.mxu0 0.0
    %82 = vmatprep.subr.mxu0 0.0
    %83 = vmatpush2.xpose.msra.mxu0 0.0
    %84 = vmatprep.subr.mxu0 0.0
    %85 = vmatpush2.xpose.msra.mxu0 0.0
    %86 = vmatprep.subr.mxu0 0.0
    %87 = vmatpush2.xpose.msra.mxu0 0.0
    %88 = vmatprep.subr.mxu0 0.0
    %89 = vmatpush2.xpose.msra.mxu0 0.0
    %90 = vmatprep.subr.mxu0 0.0
    %91 = vmatpush2.xpose.msra.mxu0 0.0
    %92 = vmatprep.subr.mxu0 0.0
    %93 = vmatpush2.xpose.msra.mxu0 0.0
    %94 = vmatprep.mubr.f32.mxu0 0.0
    %v95 = vand.u32 %v24, 4294901760
    %v96 = vsub.f32 %v24, %v95
    %v97 = vand.u32 %v96, 4294901760
    %v98 = vsub.f32 %v96, %v97
    %v99 = vand.u32 %v98, 4294901760
    %100 = vmatmul.mubr.f32.gmra.mxu0 %v99
    %v101 = vpop.f32.mrf.mxu0
    %v102 = vadd.f32 0.0, %v101
    %v103 = vpop.f32.mrf.mxu0
    %104 = vdwg.mxu0
    %105 = vmatprep.subr.mxu0 0.0
    %106 = vmatpush1.xpose.msra.mxu0 0.0
    %107 = vmatprep.subr.mxu0 0.0
    %108 = vmatpush1.xpose.msra.mxu0 0.0
    %109 = vmatprep.subr.mxu0 0.0
    %110 = vmatpush1.xpose.msra.mxu0 0.0
    %111 = vmatprep.subr.mxu0 0.0
    %112 = vmatpush1.xpose.msra.mxu0 0.0
    %113 = vmatprep.subr.mxu0 0.0
    %114 = vmatpush1.xpose.msra.mxu0 0.0
    %115 = vmatprep.subr.mxu0 0.0
    %116 = vmatpush1.xpose.msra.mxu0 0.0
    %117 = vmatprep.subr.mxu0 0.0
    %118 = vmatpush1.xpose.msra.mxu0 0.0
    %119 = vmatprep.subr.mxu0 0.0
    %120 = vmatpush1.xpose.msra.mxu0 0.0
    %121 = vmatprep.subr.mxu0 0.0
    %122 = vmatpush1.xpose.msra.mxu0 0.0
    %123 = vmatprep.subr.mxu0 0.0
    %124 = vmatpush1.xpose.msra.mxu0 0.0
    %125 = vmatprep.subr.mxu0 0.0
    %126 = vmatpush1.xpose.msra.mxu0 0.0
    %127 = vmatprep.subr.mxu0 0.0
    %128 = vmatpush1.xpose.msra.mxu0 0.0
    %129 = vmatprep.subr.mxu0 0.0
    %130 = vmatpush1.xpose.msra.mxu0 0.0
    %131 = vmatprep.subr.mxu0 0.0
    %132 = vmatpush1.xpose.msra.mxu0 0.0
    %133 = vmatprep.subr.mxu0 0.0
    %134 = vmatpush1.xpose.msra.mxu0 0.0
    %135 = vmatprep.subr.mxu0 0.0
    %v136 = vand.u32 %v27, 4294901760
    %v137 = vsub.f32 %v27, %v136
    %v138 = vand.u32 %v137, 4294901760
    %v139 = vsub.f32 %v137, %v138
    %v140 = vand.u32 %v139, 4294901760
    %141 = vmatpush1.xpose.msra.mxu0 %v140
    %142 = vmatprep.subr.mxu0 0.0
    %143 = vmatpush2.xpose.msra.mxu0 0.0
    %144 = vmatprep.subr.mxu0 0.0
    %145 = vmatpush2.xpose.msra.mxu0 0.0
    %146 = vmatprep.subr.mxu0 0.0
    %147 = vmatpush2.xpose.msra.mxu0 0.0
    %148 = vmatprep.subr.mxu0 0.0
    %149 = vmatpush2.xpose.msra.mxu0 0.0
    %150 = vmatprep.subr.mxu0 0.0
    %151 = vmatpush2.xpose.msra.mxu0 0.0
    %152 = vmatprep.subr.mxu0 0.0
    %153 = vmatpush2.xpose.msra.mxu0 0.0
    %154 = vmatprep.subr.mxu0 0.0
    %155 = vmatpush2.xpose.msra.mxu0 0.0
    %156 = vmatprep.subr.mxu0 0.0
    %157 = vmatpush2.xpose.msra.mxu0 0.0
    %158 = vmatprep.subr.mxu0 0.0
    %159 = vmatpush2.xpose.msra.mxu0 0.0
    %160 = vmatprep.subr.mxu0 0.0
    %161 = vmatpush2.xpose.msra.mxu0 0.0
    %162 = vmatprep.subr.mxu0 0.0
    %163 = vmatpush2.xpose.msra.mxu0 0.0
    %164 = vmatprep.subr.mxu0 0.0
    %165 = vmatpush2.xpose.msra.mxu0 0.0
    %166 = vmatprep.subr.mxu0 0.0
    %167 = vmatpush2.xpose.msra.mxu0 0.0
    %168 = vmatprep.subr.mxu0 0.0
    %169 = vmatpush2.xpose.msra.mxu0 0.0
    %170 = vmatprep.subr.mxu0 0.0
    %171 = vmatpush2.xpose.msra.mxu0 0.0
    %172 = vmatprep.subr.mxu0 0.0
    %173 = vmatpush2.xpose.msra.mxu0 0.0
    %174 = vmatprep.mubr.f32.mxu0 0.0
    %v175 = vand.u32 %v24, 4294901760
    %176 = vmatmul.mubr.f32.gmra.mxu0 %v175
    %v177 = vpop.f32.mrf.mxu0
    %v178 = vadd.f32 %v102, %v177
    %v179 = vpop.f32.mrf.mxu0
    %180 = vdwg.mxu0
    %181 = vmatprep.subr.mxu0 0.0
    %182 = vmatpush1.xpose.msra.mxu0 0.0
    %183 = vmatprep.subr.mxu0 0.0
    %184 = vmatpush1.xpose.msra.mxu0 0.0
    %185 = vmatprep.subr.mxu0 0.0
    %186 = vmatpush1.xpose.msra.mxu0 0.0
    %187 = vmatprep.subr.mxu0 0.0
    %188 = vmatpush1.xpose.msra.mxu0 0.0
    %189 = vmatprep.subr.mxu0 0.0
    %190 = vmatpush1.xpose.msra.mxu0 0.0
    %191 = vmatprep.subr.mxu0 0.0
    %192 = vmatpush1.xpose.msra.mxu0 0.0
    %193 = vmatprep.subr.mxu0 0.0
    %194 = vmatpush1.xpose.msra.mxu0 0.0
    %195 = vmatprep.subr.mxu0 0.0
    %196 = vmatpush1.xpose.msra.mxu0 0.0
    %197 = vmatprep.subr.mxu0 0.0
    %198 = vmatpush1.xpose.msra.mxu0 0.0
    %199 = vmatprep.subr.mxu0 0.0
    %200 = vmatpush1.xpose.msra.mxu0 0.0
    %201 = vmatprep.subr.mxu0 0.0
    %202 = vmatpush1.xpose.msra.mxu0 0.0
    %203 = vmatprep.subr.mxu0 0.0
    %204 = vmatpush1.xpose.msra.mxu0 0.0
    %205 = vmatprep.subr.mxu0 0.0
    %206 = vmatpush1.xpose.msra.mxu0 0.0
    %207 = vmatprep.subr.mxu0 0.0
    %208 = vmatpush1.xpose.msra.mxu0 0.0
    %209 = vmatprep.subr.mxu0 0.0
    %210 = vmatpush1.xpose.msra.mxu0 0.0
    %211 = vmatprep.subr.mxu0 0.0
    %v212 = vand.u32 %v27, 4294901760
    %v213 = vsub.f32 %v27, %v212
    %214 = vmatpush1.xpose.msra.mxu0 %v213
    %215 = vmatprep.subr.mxu0 0.0
    %216 = vmatpush2.xpose.msra.mxu0 0.0
    %217 = vmatprep.subr.mxu0 0.0
    %218 = vmatpush2.xpose.msra.mxu0 0.0
    %219 = vmatprep.subr.mxu0 0.0
    %220 = vmatpush2.xpose.msra.mxu0 0.0
    %221 = vmatprep.subr.mxu0 0.0
    %222 = vmatpush2.xpose.msra.mxu0 0.0
    %223 = vmatprep.subr.mxu0 0.0
    %224 = vmatpush2.xpose.msra.mxu0 0.0
    %225 = vmatprep.subr.mxu0 0.0
    %226 = vmatpush2.xpose.msra.mxu0 0.0
    %227 = vmatprep.subr.mxu0 0.0
    %228 = vmatpush2.xpose.msra.mxu0 0.0
    %229 = vmatprep.subr.mxu0 0.0
    %230 = vmatpush2.xpose.msra.mxu0 0.0
    %231 = vmatprep.subr.mxu0 0.0
    %232 = vmatpush2.xpose.msra.mxu0 0.0
    %233 = vmatprep.subr.mxu0 0.0
    %234 = vmatpush2.xpose.msra.mxu0 0.0
    %235 = vmatprep.subr.mxu0 0.0
    %236 = vmatpush2.xpose.msra.mxu0 0.0
    %237 = vmatprep.subr.mxu0 0.0
    %238 = vmatpush2.xpose.msra.mxu0 0.0
    %239 = vmatprep.subr.mxu0 0.0
    %240 = vmatpush2.xpose.msra.mxu0 0.0
    %241 = vmatprep.subr.mxu0 0.0
    %242 = vmatpush2.xpose.msra.mxu0 0.0
    %243 = vmatprep.subr.mxu0 0.0
    %244 = vmatpush2.xpose.msra.mxu0 0.0
    %245 = vmatprep.subr.mxu0 0.0
    %246 = vmatpush2.xpose.msra.mxu0 0.0
    %247 = vmatprep.mubr.f32.mxu0 0.0
    %v248 = vand.u32 %v24, 4294901760
    %v249 = vsub.f32 %v24, %v248
    %250 = vmatmul.mubr.f32.gmra.mxu0 %v249
    %v251 = vpop.f32.mrf.mxu0
    %v252 = vadd.f32 %v178, %v251
    %v253 = vpop.f32.mrf.mxu0
    %254 = vdwg.mxu0
    %255 = vmatprep.subr.mxu0 0.0
    %256 = vmatpush1.xpose.msra.mxu0 0.0
    %257 = vmatprep.subr.mxu0 0.0
    %258 = vmatpush1.xpose.msra.mxu0 0.0
    %259 = vmatprep.subr.mxu0 0.0
    %260 = vmatpush1.xpose.msra.mxu0 0.0
    %261 = vmatprep.subr.mxu0 0.0
    %262 = vmatpush1.xpose.msra.mxu0 0.0
    %263 = vmatprep.subr.mxu0 0.0
    %264 = vmatpush1.xpose.msra.mxu0 0.0
    %265 = vmatprep.subr.mxu0 0.0
    %266 = vmatpush1.xpose.msra.mxu0 0.0
    %267 = vmatprep.subr.mxu0 0.0
    %268 = vmatpush1.xpose.msra.mxu0 0.0
    %269 = vmatprep.subr.mxu0 0.0
    %270 = vmatpush1.xpose.msra.mxu0 0.0
    %271 = vmatprep.subr.mxu0 0.0
    %272 = vmatpush1.xpose.msra.mxu0 0.0
    %273 = vmatprep.subr.mxu0 0.0
    %274 = vmatpush1.xpose.msra.mxu0 0.0
    %275 = vmatprep.subr.mxu0 0.0
    %276 = vmatpush1.xpose.msra.mxu0 0.0
    %277 = vmatprep.subr.mxu0 0.0
    %278 = vmatpush1.xpose.msra.mxu0 0.0
    %279 = vmatprep.subr.mxu0 0.0
    %280 = vmatpush1.xpose.msra.mxu0 0.0
    %281 = vmatprep.subr.mxu0 0.0
    %282 = vmatpush1.xpose.msra.mxu0 0.0
    %283 = vmatprep.subr.mxu0 0.0
    %284 = vmatpush1.xpose.msra.mxu0 0.0
    %285 = vmatprep.subr.mxu0 0.0
    %v286 = vand.u32 %v27, 4294901760
    %287 = vmatpush1.xpose.msra.mxu0 %v286
    %288 = vmatprep.subr.mxu0 0.0
    %289 = vmatpush2.xpose.msra.mxu0 0.0
    %290 = vmatprep.subr.mxu0 0.0
    %291 = vmatpush2.xpose.msra.mxu0 0.0
    %292 = vmatprep.subr.mxu0 0.0
    %293 = vmatpush2.xpose.msra.mxu0 0.0
    %294 = vmatprep.subr.mxu0 0.0
    %295 = vmatpush2.xpose.msra.mxu0 0.0
    %296 = vmatprep.subr.mxu0 0.0
    %297 = vmatpush2.xpose.msra.mxu0 0.0
    %298 = vmatprep.subr.mxu0 0.0
    %299 = vmatpush2.xpose.msra.mxu0 0.0
    %300 = vmatprep.subr.mxu0 0.0
    %301 = vmatpush2.xpose.msra.mxu0 0.0
    %302 = vmatprep.subr.mxu0 0.0
    %303 = vmatpush2.xpose.msra.mxu0 0.0
    %304 = vmatprep.subr.mxu0 0.0
    %305 = vmatpush2.xpose.msra.mxu0 0.0
    %306 = vmatprep.subr.mxu0 0.0
    %307 = vmatpush2.xpose.msra.mxu0 0.0
    %308 = vmatprep.subr.mxu0 0.0
    %309 = vmatpush2.xpose.msra.mxu0 0.0
    %310 = vmatprep.subr.mxu0 0.0
    %311 = vmatpush2.xpose.msra.mxu0 0.0
    %312 = vmatprep.subr.mxu0 0.0
    %313 = vmatpush2.xpose.msra.mxu0 0.0
    %314 = vmatprep.subr.mxu0 0.0
    %315 = vmatpush2.xpose.msra.mxu0 0.0
    %316 = vmatprep.subr.mxu0 0.0
    %317 = vmatpush2.xpose.msra.mxu0 0.0
    %318 = vmatprep.subr.mxu0 0.0
    %319 = vmatpush2.xpose.msra.mxu0 0.0
    %320 = vmatprep.mubr.f32.mxu0 0.0
    %v321 = vand.u32 %v24, 4294901760
    %v322 = vsub.f32 %v24, %v321
    %v323 = vand.u32 %v322, 4294901760
    %324 = vmatmul.mubr.f32.gmra.mxu0 %v323
    %v325 = vpop.f32.mrf.mxu0
    %v326 = vadd.f32 %v252, %v325
    %v327 = vpop.f32.mrf.mxu0
    %328 = vdwg.mxu0
    %329 = vmatprep.subr.mxu0 0.0
    %330 = vmatpush1.xpose.msra.mxu0 0.0
    %331 = vmatprep.subr.mxu0 0.0
    %332 = vmatpush1.xpose.msra.mxu0 0.0
    %333 = vmatprep.subr.mxu0 0.0
    %334 = vmatpush1.xpose.msra.mxu0 0.0
    %335 = vmatprep.subr.mxu0 0.0
    %336 = vmatpush1.xpose.msra.mxu0 0.0
    %337 = vmatprep.subr.mxu0 0.0
    %338 = vmatpush1.xpose.msra.mxu0 0.0
    %339 = vmatprep.subr.mxu0 0.0
    %340 = vmatpush1.xpose.msra.mxu0 0.0
    %341 = vmatprep.subr.mxu0 0.0
    %342 = vmatpush1.xpose.msra.mxu0 0.0
    %343 = vmatprep.subr.mxu0 0.0
    %344 = vmatpush1.xpose.msra.mxu0 0.0
    %345 = vmatprep.subr.mxu0 0.0
    %346 = vmatpush1.xpose.msra.mxu0 0.0
    %347 = vmatprep.subr.mxu0 0.0
    %348 = vmatpush1.xpose.msra.mxu0 0.0
    %349 = vmatprep.subr.mxu0 0.0
    %350 = vmatpush1.xpose.msra.mxu0 0.0
    %351 = vmatprep.subr.mxu0 0.0
    %352 = vmatpush1.xpose.msra.mxu0 0.0
    %353 = vmatprep.subr.mxu0 0.0
    %354 = vmatpush1.xpose.msra.mxu0 0.0
    %355 = vmatprep.subr.mxu0 0.0
    %356 = vmatpush1.xpose.msra.mxu0 0.0
    %357 = vmatprep.subr.mxu0 0.0
    %358 = vmatpush1.xpose.msra.mxu0 0.0
    %359 = vmatprep.subr.mxu0 0.0
    %v360 = vand.u32 %v27, 4294901760
    %v361 = vsub.f32 %v27, %v360
    %v362 = vand.u32 %v361, 4294901760
    %363 = vmatpush1.xpose.msra.mxu0 %v362
    %364 = vmatprep.subr.mxu0 0.0
    %365 = vmatpush2.xpose.msra.mxu0 0.0
    %366 = vmatprep.subr.mxu0 0.0
    %367 = vmatpush2.xpose.msra.mxu0 0.0
    %368 = vmatprep.subr.mxu0 0.0
    %369 = vmatpush2.xpose.msra.mxu0 0.0
    %370 = vmatprep.subr.mxu0 0.0
    %371 = vmatpush2.xpose.msra.mxu0 0.0
    %372 = vmatprep.subr.mxu0 0.0
    %373 = vmatpush2.xpose.msra.mxu0 0.0
    %374 = vmatprep.subr.mxu0 0.0
    %375 = vmatpush2.xpose.msra.mxu0 0.0
    %376 = vmatprep.subr.mxu0 0.0
    %377 = vmatpush2.xpose.msra.mxu0 0.0
    %378 = vmatprep.subr.mxu0 0.0
    %379 = vmatpush2.xpose.msra.mxu0 0.0
    %380 = vmatprep.subr.mxu0 0.0
    %381 = vmatpush2.xpose.msra.mxu0 0.0
    %382 = vmatprep.subr.mxu0 0.0
    %383 = vmatpush2.xpose.msra.mxu0 0.0
    %384 = vmatprep.subr.mxu0 0.0
    %385 = vmatpush2.xpose.msra.mxu0 0.0
    %386 = vmatprep.subr.mxu0 0.0
    %387 = vmatpush2.xpose.msra.mxu0 0.0
    %388 = vmatprep.subr.mxu0 0.0
    %389 = vmatpush2.xpose.msra.mxu0 0.0
    %390 = vmatprep.subr.mxu0 0.0
    %391 = vmatpush2.xpose.msra.mxu0 0.0
    %392 = vmatprep.subr.mxu0 0.0
    %393 = vmatpush2.xpose.msra.mxu0 0.0
    %394 = vmatprep.subr.mxu0 0.0
    %395 = vmatpush2.xpose.msra.mxu0 0.0
    %396 = vmatprep.mubr.f32.mxu0 0.0
    %v397 = vand.u32 %v24, 4294901760
    %398 = vmatmul.mubr.f32.gmra.mxu0 %v397
    %v399 = vpop.f32.mrf.mxu0
    %v400 = vadd.f32 %v326, %v399
    %v401 = vpop.f32.mrf.mxu0
    %402 = vdwg.mxu0
    %403 = vmatprep.subr.mxu0 0.0
    %404 = vmatpush1.xpose.msra.mxu0 0.0
    %405 = vmatprep.subr.mxu0 0.0
    %406 = vmatpush1.xpose.msra.mxu0 0.0
    %407 = vmatprep.subr.mxu0 0.0
    %408 = vmatpush1.xpose.msra.mxu0 0.0
    %409 = vmatprep.subr.mxu0 0.0
    %410 = vmatpush1.xpose.msra.mxu0 0.0
    %411 = vmatprep.subr.mxu0 0.0
    %412 = vmatpush1.xpose.msra.mxu0 0.0
    %413 = vmatprep.subr.mxu0 0.0
    %414 = vmatpush1.xpose.msra.mxu0 0.0
    %415 = vmatprep.subr.mxu0 0.0
    %416 = vmatpush1.xpose.msra.mxu0 0.0
    %417 = vmatprep.subr.mxu0 0.0
    %418 = vmatpush1.xpose.msra.mxu0 0.0
    %419 = vmatprep.subr.mxu0 0.0
    %420 = vmatpush1.xpose.msra.mxu0 0.0
    %421 = vmatprep.subr.mxu0 0.0
    %422 = vmatpush1.xpose.msra.mxu0 0.0
    %423 = vmatprep.subr.mxu0 0.0
    %424 = vmatpush1.xpose.msra.mxu0 0.0
    %425 = vmatprep.subr.mxu0 0.0
    %426 = vmatpush1.xpose.msra.mxu0 0.0
    %427 = vmatprep.subr.mxu0 0.0
    %428 = vmatpush1.xpose.msra.mxu0 0.0
    %429 = vmatprep.subr.mxu0 0.0
    %430 = vmatpush1.xpose.msra.mxu0 0.0
    %431 = vmatprep.subr.mxu0 0.0
    %432 = vmatpush1.xpose.msra.mxu0 0.0
    %433 = vmatprep.subr.mxu0 0.0
    %v434 = vand.u32 %v27, 4294901760
    %435 = vmatpush1.xpose.msra.mxu0 %v434
    %436 = vmatprep.subr.mxu0 0.0
    %437 = vmatpush2.xpose.msra.mxu0 0.0
    %438 = vmatprep.subr.mxu0 0.0
    %439 = vmatpush2.xpose.msra.mxu0 0.0
    %440 = vmatprep.subr.mxu0 0.0
    %441 = vmatpush2.xpose.msra.mxu0 0.0
    %442 = vmatprep.subr.mxu0 0.0
    %443 = vmatpush2.xpose.msra.mxu0 0.0
    %444 = vmatprep.subr.mxu0 0.0
    %445 = vmatpush2.xpose.msra.mxu0 0.0
    %446 = vmatprep.subr.mxu0 0.0
    %447 = vmatpush2.xpose.msra.mxu0 0.0
    %448 = vmatprep.subr.mxu0 0.0
    %449 = vmatpush2.xpose.msra.mxu0 0.0
    %450 = vmatprep.subr.mxu0 0.0
    %451 = vmatpush2.xpose.msra.mxu0 0.0
    %452 = vmatprep.subr.mxu0 0.0
    %453 = vmatpush2.xpose.msra.mxu0 0.0
    %454 = vmatprep.subr.mxu0 0.0
    %455 = vmatpush2.xpose.msra.mxu0 0.0
    %456 = vmatprep.subr.mxu0 0.0
    %457 = vmatpush2.xpose.msra.mxu0 0.0
    %458 = vmatprep.subr.mxu0 0.0
    %459 = vmatpush2.xpose.msra.mxu0 0.0
    %460 = vmatprep.subr.mxu0 0.0
    %461 = vmatpush2.xpose.msra.mxu0 0.0
    %462 = vmatprep.subr.mxu0 0.0
    %463 = vmatpush2.xpose.msra.mxu0 0.0
    %464 = vmatprep.subr.mxu0 0.0
    %465 = vmatpush2.xpose.msra.mxu0 0.0
    %466 = vmatprep.subr.mxu0 0.0
    %467 = vmatpush2.xpose.msra.mxu0 0.0
    %468 = vmatprep.mubr.f32.mxu0 0.0
    %v469 = vand.u32 %v24, 4294901760
    %470 = vmatmul.mubr.f32.gmra.mxu0 %v469
    %v471 = vpop.f32.mrf.mxu0
    %v472 = vadd.f32 %v400, %v471
    %v473 = vpop.f32.mrf.mxu0
    %474 = vdwg.mxu0
    %v475 = vmul.f32 %v472, 0.0625
    %vm476 = vcmask 57344
    %477 = vst.msk [vmem:[#allocation5] sm:$0x1] %vm476, %v475
    // Predicated region
    $region10: #{tpu_custom_call.1} parent=1 // pred_check
      _
    $region11: #{tpu_custom_call.1} parent=1 // pred_check_branch
      %479 = sbr.rel (0) target = $region13
    $region12: #{tpu_custom_call.1} parent=1 // pred_region
      %s481 = ssub.s32 16, 16
      %482 = vsyncadd [#allocation4], %s481
      %s484 = sshll.u32 [#allocation5], 4
      %s485 = int_to_ptr.vmem [resolvable:$true] %s484
      %487 = dma.vmem_to_hbm [thread:$0]  %s485, 16, %s1, [#allocation4]
    $region13: #{tpu_custom_call.1} parent=1 // pred_fallthru
      _
    // Predicated region
    $region14: #{tpu_custom_call.1} parent=1 // pred_check
      _
    $region15: #{tpu_custom_call.1} parent=1 // pred_check_branch
      %489 = sbr.rel (0) target = $region17
    $region16: #{tpu_custom_call.1} parent=1 // pred_region
      %490 = dma.done [#allocation4], 16
    $region17: #{tpu_custom_call.1} parent=1 // pred_fallthru
      _
    %491 = vsyncpa [#allocation3], 1
    %492 = vsyncpa [#allocation4], 1

</llo_original>
